<compile_context>
chip_gen: v6e
topology: v6e:2x2x1
jax: 0.10.0
libtpu: 0.0.40
codegen_flags: <defaults>
</compile_context>

<pallas_src>
import functools

import jax
import jax.numpy as jnp
from jax.experimental import pallas as pl
from jax.experimental.pallas import tpu as pltpu

_MIB = 1 << 20


def _vmem_budget_bytes():
    """Generation-aware per-core VMEM budget (~0.75x capacity).
    v5e/v6e: ~96 MiB, v7x: ~48 MiB. Conservative 48 MiB fallback on failure."""
    cap = 64 * _MIB
    try:
        info = pltpu.get_tpu_info()
        cap = int(getattr(info, "vmem_capacity_bytes", cap)) or cap
    except Exception:
        pass
    return (cap * 3) // 4


# ---------------------------------------------------------------------------
# Single-pass kernel: (bt, C, S) slab resident; pool + MLP + scale.
# One HBM read + one HBM write of x.  The spatial block equals the FULL array
# extent, so no padding or masking is ever needed.
# ---------------------------------------------------------------------------
def _ca_fused_kernel(x_ref, w1_ref, w2_ref, o_ref, *, inv_s):
    x = x_ref[...]                                            # (bt, C, S)
    bt = x.shape[0]

    # Global average / max pools over the true spatial extent.
    avg = jnp.sum(x, axis=-1, dtype=jnp.float32) * inv_s      # (bt, C)
    mx = jnp.max(x, axis=-1).astype(jnp.float32)              # (bt, C)

    # Fused shared MLP: one (2*bt, C) @ w1^T and one (2*bt, Ch) @ w2^T matmul
    # instead of 4*bt serial N=1 mat-vecs.
    p = jnp.concatenate([avg, mx], axis=0)                    # (2*bt, C)
    w1 = w1_ref[...].astype(jnp.float32)                      # (Ch, C)
    w2 = w2_ref[...].astype(jnp.float32)                      # (C, Ch)
    h = jnp.maximum(
        jax.lax.dot_general(p, w1, (((1,), (1,)), ((), ())),
                            preferred_element_type=jnp.float32), 0.0)
    g = jax.lax.dot_general(h, w2, (((1,), (1,)), ((), ())),
                            preferred_element_type=jnp.float32)  # (2*bt, C)
    gate = jax.nn.sigmoid(g[:bt] + g[bt:])                       # (bt, C) f32

    # Gate rounded to x.dtype before the multiply (sufficient for CBAM gating;
    # avoids a full-slab f32 temporary for bf16 inputs).
    o_ref[...] = (gate.astype(x.dtype)[:, :, None] * x).astype(o_ref.dtype)


# ---------------------------------------------------------------------------
# Two-pass fallback, pass 1: streaming pooling + MLP -> gates (B, C, 1).
# ---------------------------------------------------------------------------
def _ca_pool_gate_kernel(x_ref, w1_ref, w2_ref, gate_ref, sum_sc, max_sc,
                         *, s_true, inv_s, ts, need_mask):
    s_idx = pl.program_id(1)

    @pl.when(s_idx == 0)
    def _init():
        sum_sc[...] = jnp.zeros_like(sum_sc)
        max_sc[...] = jnp.full_like(max_sc, -jnp.inf)

    x = x_ref[...]                                            # (1, C, ts)
    if need_mask:
        # Ragged tail tile (pl.cdiv grid): out-of-bounds lanes hold
        # unspecified data -> mask them for BOTH sum (->0) and max (->-inf).
        lane = jax.lax.broadcasted_iota(jnp.int32, x.shape, 2) + s_idx * ts
        valid = lane < s_true
        x_sum = jnp.where(valid, x, jnp.zeros((), x.dtype))
        x_max = jnp.where(valid, x, jnp.array(-jnp.inf, x.dtype))
    else:
        x_sum = x
        x_max = x
    sum_sc[...] += jnp.sum(x_sum, axis=-1, dtype=jnp.float32)          # (1, C)
    max_sc[...] = jnp.maximum(max_sc[...],
                              jnp.max(x_max, axis=-1).astype(jnp.float32))

    @pl.when(s_idx == pl.num_programs(1) - 1)
    def _finish():
        avg = sum_sc[...] * inv_s                                       # (1, C)
        p = jnp.concatenate([avg, max_sc[...]], axis=0)                 # (2, C)
        w1 = w1_ref[...].astype(jnp.float32)
        w2 = w2_ref[...].astype(jnp.float32)
        h = jnp.maximum(
            jax.lax.dot_general(p, w1, (((1,), (1,)), ((), ())),
                                preferred_element_type=jnp.float32), 0.0)
        g = jax.lax.dot_general(h, w2, (((1,), (1,)), ((), ())),
                                preferred_element_type=jnp.float32)     # (2, C)
        gate = jax.nn.sigmoid(g[:1] + g[1:])                            # (1, C)
        gate_ref[...] = gate[:, :, None].astype(gate_ref.dtype)         # (1,C,1)


# ---------------------------------------------------------------------------
# Two-pass fallback, pass 2: streaming elementwise scale.
# OOB lanes of the ragged tail tile are write-masked by Pallas.
# ---------------------------------------------------------------------------
def _ca_scale_kernel(x_ref, gate_ref, o_ref):
    x = x_ref[...]                                            # (1, C, ts)
    gate = gate_ref[...].astype(x.dtype)                      # (1, C, 1)
    o_ref[...] = (x * gate).astype(o_ref.dtype)


def _pick_bt(B, slab_bytes, max_block_bytes):
    """Batch fold factor: <= max_block_bytes of x per grid step, divides B,
    keeps >= min(B, 4) grid steps (DMA overlap + both v7x TensorCores fed)
    and prefers an even step count (v7x TC balance)."""
    bt = max(1, min(B, int(max_block_bytes) // max(slab_bytes, 1)))
    bt = min(bt, max(1, B // min(B, 4)))
    while B % bt:
        bt -= 1
    if (B // bt) % 2 and B % 2 == 0:
        cand = bt - 1
        while cand >= 1:
            if B % cand == 0 and (B // cand) % 2 == 0:
                bt = cand
                break
            cand -= 1
    return bt


def _pick_ts(C, S, itemsize, vmem_budget, target_bytes=4 * _MIB):
    """Lane-dense spatial tile (multiple of 128, >= 512 lanes when possible)
    for the streaming two-pass path, clamped to the VMEM budget."""
    ts = max(512, (int(target_bytes) // max(C * itemsize, 1)) // 128 * 128)
    per_lane = C * (4 * itemsize + 4 * 4)   # dbl-buffered in/out + f32 temps
    max_ts = ((vmem_budget - 8 * _MIB) // max(per_lane, 1)) // 128 * 128
    ts = min(ts, max(max_ts, 128))
    ts = min(ts, pl.cdiv(S, 128) * 128)     # never wider than spatial extent
    return max(ts, 128)


def channel_attention(x, w1, w2, *, force_two_pass=False, donate_x=False):
    """x: (B, C, H, W); w1: (C//ratio, C); w2: (C, C//ratio).  Returns gate*x."""
    B, C, H, W = x.shape
    Ch = w1.shape[0]
    S = H * W
    inv_s = 1.0 / S

    xf = x.reshape(B, C, S)                 # trivial reshape, no extra HBM pass
    itemsize = xf.dtype.itemsize
    w_bytes = w1.size * w1.dtype.itemsize + w2.size * w2.dtype.itemsize
    slab_bytes = C * S * itemsize           # one batch element
    budget = _vmem_budget_bytes()
    # Set donate_x=True only when x is dead after this op.
    io_alias = {0: 0} if donate_x else {}

    # Single-pass needs (per grid step) double-buffered in + out blocks plus
    # ~1 block of elementwise temporaries to fit the per-core VMEM budget.
    fits_single = (5 * slab_bytes + 4 * w_bytes + 4 * _MIB) <= budget
    bt, steps = 1, B
    if fits_single:
        max_block = min(8 * _MIB, (budget - 4 * w_bytes - 4 * _MIB) // 5)
        bt = _pick_bt(B, slab_bytes, max_block)
        steps = B // bt
        # A 1-step grid has no prefetch/writeback overlap; for large slabs the
        # streaming two-pass path wins despite re-reading x.
        if steps < 2 and bt * slab_bytes > 4 * _MIB:
            fits_single = False

    if fits_single and not force_two_pass:
        out = pl.pallas_call(
            functools.partial(_ca_fused_kernel, inv_s=inv_s),
            out_shape=jax.ShapeDtypeStruct((B, C, S), xf.dtype),
            grid_spec=pltpu.PrefetchScalarGridSpec(
                num_scalar_prefetch=0,
                grid=(steps,),
                in_specs=[
                    pl.BlockSpec((bt, C, S), lambda b: (b, 0, 0)),
                    pl.BlockSpec((Ch, C), lambda b: (0, 0)),
                    pl.BlockSpec((C, Ch), lambda b: (0, 0)),
                ],
                out_specs=pl.BlockSpec((bt, C, S), lambda b: (b, 0, 0)),
            ),
            compiler_params=pltpu.CompilerParams(
                dimension_semantics=("parallel",),
                vmem_limit_bytes=int(budget)),
            input_output_aliases=io_alias,
        )(xf, w1, w2)
    else:
        ts = _pick_ts(C, S, itemsize, budget)
        n_s = pl.cdiv(S, ts)
        need_mask = (S % ts) != 0

        # ---- pass 1: streaming pooling + MLP -> per-channel gates (B, C, 1)
        gates = pl.pallas_call(
            functools.partial(_ca_pool_gate_kernel, s_true=S, inv_s=inv_s,
                              ts=ts, need_mask=need_mask),
            out_shape=jax.ShapeDtypeStruct((B, C, 1), jnp.float32),
            grid_spec=pltpu.PrefetchScalarGridSpec(
                num_scalar_prefetch=0,
                grid=(B, n_s),
                in_specs=[
                    pl.BlockSpec((1, C, ts), lambda b, s: (b, 0, s)),
                    pl.BlockSpec((Ch, C), lambda b, s: (0, 0)),
                    pl.BlockSpec((C, Ch), lambda b, s: (0, 0)),
                ],
                out_specs=pl.BlockSpec((1, C, 1), lambda b, s: (b, 0, 0)),
                scratch_shapes=[pltpu.VMEM((1, C), jnp.float32),
                                pltpu.VMEM((1, C), jnp.float32)],
            ),
            compiler_params=pltpu.CompilerParams(
                dimension_semantics=("parallel", "arbitrary"),
                vmem_limit_bytes=int(budget)),
        )(xf, w1, w2)

        # ---- pass 2: streaming elementwise scale ----------------------------
        out = pl.pallas_call(
            _ca_scale_kernel,
            out_shape=jax.ShapeDtypeStruct((B, C, S), xf.dtype),
            grid_spec=pltpu.PrefetchScalarGridSpec(
                num_scalar_prefetch=0,
                grid=(B, n_s),
                in_specs=[
                    pl.BlockSpec((1, C, ts), lambda b, s: (b, 0, s)),
                    pl.BlockSpec((1, C, 1), lambda b, s: (b, 0, 0)),
                ],
                out_specs=pl.BlockSpec((1, C, ts), lambda b, s: (b, 0, s)),
            ),
            compiler_params=pltpu.CompilerParams(
                dimension_semantics=("parallel", "parallel"),
                vmem_limit_bytes=int(budget)),
            input_output_aliases=io_alias,
        )(xf, gates)

    return out.reshape(B, C, H, W)


def channel_attention_ref(x, w1, w2):
    """Pure-JAX reference mirroring the PyTorch forward."""
    avg = jnp.mean(x, axis=(2, 3))                      # (B, C)
    mx = jnp.max(x, axis=(2, 3))                        # (B, C)

    def mlp(p):                                         # p: (B, C)
        return jnp.maximum(p @ w1.T, 0.0) @ w2.T

    gate = jax.nn.sigmoid(mlp(avg) + mlp(mx))           # (B, C)
    return gate[:, :, None, None] * x


if __name__ == "__main__":
    key = jax.random.PRNGKey(0)

    # --- shape 1: 128-aligned spatial (B=4, C=64, 16x16, ratio=16) ----------
    B, C, H, W, ratio = 4, 64, 16, 16, 16
    Ch = C // ratio                                     # 4
    kx, k1, k2, k3 = jax.random.split(key, 4)
    x = jax.random.normal(kx, (B, C, H, W), dtype=jnp.float32)
    w1 = jax.random.normal(k1, (Ch, C), dtype=jnp.float32) * 0.1
    w2 = jax.random.normal(k2, (C, Ch), dtype=jnp.float32) * 0.1

    ref = channel_attention_ref(x, w1, w2)

    out = jax.block_until_ready(channel_attention(x, w1, w2))
    assert out.shape == (B, C, H, W)
    assert jnp.allclose(out, ref, atol=1e-5, rtol=1e-5), "single-pass mismatch"

    out2 = jax.block_until_ready(channel_attention(x, w1, w2,
                                                   force_two_pass=True))
    assert jnp.allclose(out2, ref, atol=1e-5, rtol=1e-5), "two-pass mismatch"

    # bf16 I/O (pooling / MLP / sigmoid stay in f32): halves HBM traffic.
    xb = x.astype(jnp.bfloat16)
    outb = jax.block_until_ready(channel_attention(xb, w1, w2))
    refb = channel_attention_ref(xb.astype(jnp.float32), w1, w2)
    assert outb.dtype == jnp.bfloat16
    assert jnp.allclose(outb.astype(jnp.float32), refb, atol=5e-2, rtol=5e-2), \
        "bf16 mismatch"

    # --- shape 2: non-128-aligned spatial (B=2, C=32, 14x14) ----------------
    # Exercises the no-pad / no-slice path and the ragged-tail masking.
    B2, C2, H2, W2 = 2, 32, 14, 14
    Ch2 = max(C2 // ratio, 1)                           # 2
    kx2, k4, k5 = jax.random.split(k3, 3)
    x2 = jax.random.normal(kx2, (B2, C2, H2, W2), dtype=jnp.float32)
    w1b = jax.random.normal(k4, (Ch2, C2), dtype=jnp.float32) * 0.1
    w2b = jax.random.normal(k5, (C2, Ch2), dtype=jnp.float32) * 0.1
    ref2 = channel_attention_ref(x2, w1b, w2b)

    o_sp = jax.block_until_ready(channel_attention(x2, w1b, w2b))
    assert jnp.allclose(o_sp, ref2, atol=1e-5, rtol=1e-5), \
        "ragged single-pass mismatch"
    o_tp = jax.block_until_ready(channel_attention(x2, w1b, w2b,
                                                   force_two_pass=True))
    assert jnp.allclose(o_tp, ref2, atol=1e-5, rtol=1e-5), \
        "ragged two-pass mismatch"

    print("KERNEL_OK")
</pallas_src>

<mosaic_0001>
module attributes {stable_mosaic.version = 11 : i64} {
  func.func @_ca_fused_kernel(%arg0: i32, %arg1: memref<1x64x256xf32, #tpu.memory_space<vmem>>, %arg2: memref<4x64xf32, #tpu.memory_space<vmem>>, %arg3: memref<64x4xf32, #tpu.memory_space<vmem>>, %arg4: memref<1x64x256xf32, #tpu.memory_space<vmem>>) attributes {dimension_semantics = [#tpu.dimension_semantics<parallel>], iteration_bounds = array<i64: 4>, scalar_prefetch = 0 : i64, scratch_operands = 0 : i64, tpu.core_type = #tpu.core_type<tc>, window_params = [{transform_indices = @transform_0, window_bounds = array<i64: 1, 64, 256>}, {pipeline_mode = #tpu.pipeline_mode<synchronous>, transform_indices = @transform_1, window_bounds = array<i64: 4, 64>}, {pipeline_mode = #tpu.pipeline_mode<synchronous>, transform_indices = @transform_2, window_bounds = array<i64: 64, 4>}, {transform_indices = @transform_3, window_bounds = array<i64: 1, 64, 256>}]} {
    %c0 = arith.constant 0 : index
    %c0_0 = arith.constant 0 : index
    %c0_1 = arith.constant 0 : index
    %0 = vector.load %arg1[%c0, %c0_0, %c0_1] : memref<1x64x256xf32, #tpu.memory_space<vmem>>, vector<1x64x256xf32>
    %cst = arith.constant dense<0.000000e+00> : vector<1x64xf32>
    %1 = vector.multi_reduction <add>, %0, %cst [2] : vector<1x64x256xf32> to vector<1x64xf32>
    %cst_2 = arith.constant 3.906250e-03 : f32
    %2 = vector.broadcast %cst_2 : f32 to vector<1x64xf32>
    %3 = arith.mulf %1, %2 : vector<1x64xf32>
    %cst_3 = arith.constant dense<0xFF800000> : vector<1x64xf32>
    %4 = vector.multi_reduction <maximumf>, %0, %cst_3 [2] : vector<1x64x256xf32> to vector<1x64xf32>
    %5 = tpu.concatenate %3, %4 in 0 : vector<1x64xf32>, vector<1x64xf32> -> vector<2x64xf32>
    %c0_4 = arith.constant 0 : index
    %c0_5 = arith.constant 0 : index
    %6 = vector.load %arg2[%c0_4, %c0_5] : memref<4x64xf32, #tpu.memory_space<vmem>>, vector<4x64xf32>
    %c0_6 = arith.constant 0 : index
    %c0_7 = arith.constant 0 : index
    %7 = vector.load %arg3[%c0_6, %c0_7] : memref<64x4xf32, #tpu.memory_space<vmem>>, vector<64x4xf32>
    %cst_8 = arith.constant dense<0.000000e+00> : vector<2x4xf32>
    %8 = tpu.matmul %5, %6, %cst_8 {dimension_numbers = #tpu.dot_dimension_numbers<[1], [1], [0], [0], [0, 0, 1, 0], [], []>} : vector<2x64xf32>, vector<4x64xf32>, vector<2x4xf32> -> vector<2x4xf32>
    %cst_9 = arith.constant 0.000000e+00 : f32
    %9 = vector.broadcast %cst_9 : f32 to vector<2x4xf32>
    %10 = arith.maximumf %8, %9 : vector<2x4xf32>
    %cst_10 = arith.constant dense<0.000000e+00> : vector<2x64xf32>
    %11 = tpu.matmul %10, %7, %cst_10 {dimension_numbers = #tpu.dot_dimension_numbers<[1], [1], [0], [0], [0, 0, 1, 0], [], []>} : vector<2x4xf32>, vector<64x4xf32>, vector<2x64xf32> -> vector<2x64xf32>
    %12 = vector.extract_strided_slice %11 {offsets = [0, 0], sizes = [1, 64], strides = [1, 1]} : vector<2x64xf32> to vector<1x64xf32>
    %13 = vector.extract_strided_slice %11 {offsets = [1, 0], sizes = [1, 64], strides = [1, 1]} : vector<2x64xf32> to vector<1x64xf32>
    %14 = arith.addf %12, %13 : vector<1x64xf32>
    %15 = arith.negf %14 : vector<1x64xf32>
    %16 = math.exp %15 : vector<1x64xf32>
    %cst_11 = arith.constant 1.000000e+00 : f32
    %17 = vector.broadcast %cst_11 : f32 to vector<1x64xf32>
    %18 = arith.addf %17, %16 : vector<1x64xf32>
    %19 = arith.divf %17, %18 : vector<1x64xf32>
    %20 = vector.shape_cast %19 : vector<1x64xf32> to vector<1x64x1xf32>
    %21 = vector.broadcast %20 : vector<1x64x1xf32> to vector<1x64x256xf32>
    %22 = arith.mulf %21, %0 : vector<1x64x256xf32>
    %c0_12 = arith.constant 0 : index
    %c0_13 = arith.constant 0 : index
    %c0_14 = arith.constant 0 : index
    %23 = vector.load %arg4[%c0_12, %c0_13, %c0_14] : memref<1x64x256xf32, #tpu.memory_space<vmem>>, vector<1x64x256xf32>
    tpu.vector_store %arg4[%c0_12, %c0_13, %c0_14], %22 {strides = array<i32>} : memref<1x64x256xf32, #tpu.memory_space<vmem>>, vector<1x64x256xf32>,
    return
  }
  func.func @transform_0(%arg0: i32) -> (i32, i32, i32) {
    %c0_i32 = arith.constant 0 : i32
    %c0_i32_0 = arith.constant 0 : i32
    %c0_i32_1 = arith.constant 0 : i32
    return %arg0, %c0_i32, %c0_i32_0 : i32, i32, i32
  }
  func.func @transform_1(%arg0: i32) -> (i32, i32) {
    %c0_i32 = arith.constant 0 : i32
    %c0_i32_0 = arith.constant 0 : i32
    %c0_i32_1 = arith.constant 0 : i32
    return %c0_i32, %c0_i32_0 : i32, i32
  }
  func.func @transform_2(%arg0: i32) -> (i32, i32) {
    %c0_i32 = arith.constant 0 : i32
    %c0_i32_0 = arith.constant 0 : i32
    %c0_i32_1 = arith.constant 0 : i32
    return %c0_i32, %c0_i32_0 : i32, i32
  }
  func.func @transform_3(%arg0: i32) -> (i32, i32, i32) {
    %c0_i32 = arith.constant 0 : i32
    %c0_i32_0 = arith.constant 0 : i32
    %c0_i32_1 = arith.constant 0 : i32
    return %arg0, %c0_i32, %c0_i32_0 : i32, i32, i32
  }
}

</mosaic_0001>

<llo_original>
// kernel: tpu_custom_call.1
$region0: #{tpu_custom_call.1}
  #allocation0 [shape = 'u32[]', space=smem, size = 0x4, offset = 0x4, fixed_abs, tag = 'smem constant byte address 0x4 - core index']
  #allocation1 [shape = 'u32[144,128]{1,0:T(1,128)}', space=vmem, size = 0x12000, scoped, tag = 'internal scratch']
  %s0 = inlined_call_operand.hbm [shape: f32[4,64,256], index: 0, kind: input, shape index: {}]
  %s1 = inlined_call_operand.vmem [shape: f32[4,64], index: 1, kind: input, shape index: {}]
  %s2 = inlined_call_operand.vmem [shape: f32[64,4], index: 2, kind: input, shape index: {}]
  %s3 = inlined_call_operand.hbm [shape: f32[4,64,256], index: 3, kind: output, shape index: {}]
  %s4 = sld [smem:[#allocation0]]
  $region49: #{tpu_custom_call.1} parent=0
    _
  %s6 = ssub.s32 1, %s4
  %s7 = scalar_select 0, %s6, %s4
  $region1: #{tpu_custom_call.1} parent=0
    #allocation2 [shape = 'u8[131072]{0}', space=vmem, size = 0x20000, scoped, tag = 'input window, operand 0']
    #allocation3 [shape = 's32[2]{0}', space=sflag, size = 0x8, scoped, tag = 'scoped memory for tpu_custom_call.1']
    #allocation4 [shape = 's32[2]{0}', space=sflag, size = 0x8, scoped, tag = 'scoped memory for tpu_custom_call.1']
    #allocation5 [shape = 'u8[131072]{0}', space=vmem, size = 0x20000, scoped, tag = 'output window, operand 0']
    %8 = vsyncpa [#allocation3], 0
    %s9 = scalar_lea.sflag [#allocation3], 1
    %10 = vsyncpa %s9, 0
    %11 = vsyncpa [#allocation4], 0
    %s12 = scalar_lea.sflag [#allocation4], 1
    %13 = vsyncpa %s12, 0
    loop: start=0, step=1, limit=6
    $region2: #{tpu_custom_call.1} parent=1 // loop_pre_header
      _
    $region3: #{tpu_custom_call.1} parent=1 // loop_header
      %s15 = sphi 0, %s19
      %p16 = scmp.ge.s32.totalorder %s15, 6
      %s25 = sphi 0, %s27
      %s28 = sphi 0, %s25
      %s29 = sphi 0, %s28
      %s45 = sphi 0, %s29
      %s49 = sphi 0, %s49
      %s51 = sphi 0, %s49
      %s52 = sphi 0, %s51
      %s66 = sphi 0, %s52
      %s70 = sphi 0, %s70
      %s72 = sphi 0, %s70
      %s73 = sphi 0, %s72
      %s87 = sphi 0, %s73
      %s93 = sphi 0, %s95
      %s96 = sphi 0, %s93
      %s97 = sphi 0, %s96
      %s113 = sphi 0, %s97
    $region4: #{tpu_custom_call.1} parent=1 // loop_header_branch
      %18 = sbr.rel (%p16) target = $region8
    $region5: #{tpu_custom_call.1} parent=1 // loop_body
      %s20 = ssub.s32 %s15, 1
      %s21 = ssub.s32 %s15, 2
      %s22 = sadd.s32 %s15, 1
      %s23 = ssub.s32 %s15, %s22
      %p24 = scmp.eq.s32.totalorder %s23, 0
      %s26 = sadd.s32 %s25, 1
      %s27 = scalar_select %p24, %s25, %s26
      %p30 = pneg %p24
      %p31 = scmp.eq.s32.totalorder %s15, 3
      %p32 = por %p30, %p31
      %p33 = scmp.ne.s32.totalorder %s25, %s28
      %p34 = scmp.eq.s32.totalorder %s15, 0
      %p35 = por %p33, %p34
      %p36 = scmp.ne.s32.totalorder %s25, %s28
      %p37 = scmp.eq.s32.totalorder %s20, 3
      %p38 = por %p36, %p37
      %p39 = scmp.ne.s32.totalorder %s28, %s29
      %p40 = scmp.eq.s32.totalorder %s20, 0
      %p41 = por %p39, %p40
      %p42 = scmp.ne.s32.totalorder %s28, %s29
      %p43 = scmp.eq.s32.totalorder %s21, 3
      %p44 = por %p42, %p43
      %p46 = scmp.ne.s32.totalorder %s29, %s45
      %p47 = scmp.eq.s32.totalorder %s21, 0
      %p48 = por %p46, %p47
      %s50 = sadd.s32 %s49, 1
      %p53 = scmp.eq.s32.totalorder %s15, 3
      %p54 = scmp.ne.s32.totalorder %s49, %s51
      %p55 = scmp.eq.s32.totalorder %s15, 0
      %p56 = por %p54, %p55
      %p57 = scmp.ne.s32.totalorder %s49, %s51
      %p58 = scmp.eq.s32.totalorder %s20, 3
      %p59 = por %p57, %p58
      %p60 = scmp.ne.s32.totalorder %s51, %s52
      %p61 = scmp.eq.s32.totalorder %s20, 0
      %p62 = por %p60, %p61
      %p63 = scmp.ne.s32.totalorder %s51, %s52
      %p64 = scmp.eq.s32.totalorder %s21, 3
      %p65 = por %p63, %p64
      %p67 = scmp.ne.s32.totalorder %s52, %s66
      %p68 = scmp.eq.s32.totalorder %s21, 0
      %p69 = por %p67, %p68
      %s71 = sadd.s32 %s70, 1
      %p74 = scmp.eq.s32.totalorder %s15, 3
      %p75 = scmp.ne.s32.totalorder %s70, %s72
      %p76 = scmp.eq.s32.totalorder %s15, 0
      %p77 = por %p75, %p76
      %p78 = scmp.ne.s32.totalorder %s70, %s72
      %p79 = scmp.eq.s32.totalorder %s20, 3
      %p80 = por %p78, %p79
      %p81 = scmp.ne.s32.totalorder %s72, %s73
      %p82 = scmp.eq.s32.totalorder %s20, 0
      %p83 = por %p81, %p82
      %p84 = scmp.ne.s32.totalorder %s72, %s73
      %p85 = scmp.eq.s32.totalorder %s21, 3
      %p86 = por %p84, %p85
      %p88 = scmp.ne.s32.totalorder %s73, %s87
      %p89 = scmp.eq.s32.totalorder %s21, 0
      %p90 = por %p88, %p89
      %s91 = ssub.s32 %s15, %s22
      %p92 = scmp.eq.s32.totalorder %s91, 0
      %s94 = sadd.s32 %s93, 1
      %s95 = scalar_select %p92, %s93, %s94
      %p98 = pneg %p92
      %p99 = scmp.eq.s32.totalorder %s15, 3
      %p100 = por %p98, %p99
      %p101 = scmp.ne.s32.totalorder %s93, %s96
      %p102 = scmp.eq.s32.totalorder %s15, 0
      %p103 = por %p101, %p102
      %p104 = scmp.ne.s32.totalorder %s93, %s96
      %p105 = scmp.eq.s32.totalorder %s20, 3
      %p106 = por %p104, %p105
      %p107 = scmp.ne.s32.totalorder %s96, %s97
      %p108 = scmp.eq.s32.totalorder %s20, 0
      %p109 = por %p107, %p108
      %p110 = scmp.ne.s32.totalorder %s96, %s97
      %p111 = scmp.eq.s32.totalorder %s21, 3
      %p112 = por %p110, %p111
      %p114 = scmp.ne.s32.totalorder %s97, %s113
      %p115 = scmp.eq.s32.totalorder %s21, 0
      %p116 = por %p114, %p115
      %p117 = scmp.le.s32.totalorder 1, %s15
      %p118 = scmp.lt.s32.totalorder %s15, 5
      %p119 = pnand %p117, %p118
      %p120 = pneg %p119
      // Predicated region
      $region9: #{tpu_custom_call.1} parent=5 // pred_check
        _
      $region10: #{tpu_custom_call.1} parent=5 // pred_check_branch
        %122 = sbr.rel (%p119) target = $region12
      $region11: #{tpu_custom_call.1} parent=5 // pred_region
        %s123 = ssub.s32 %s15, 1
        // Predicated region
        $region13: #{tpu_custom_call.1} parent=11 // pred_check
          %p124 = pneg %p62
        $region14: #{tpu_custom_call.1} parent=11 // pred_check_branch
          %126 = sbr.rel (%p124) target = $region16
        $region15: #{tpu_custom_call.1} parent=11 // pred_region
          _
        $region16: #{tpu_custom_call.1} parent=11 // pred_fallthru
          _
        // Predicated region
        $region17: #{tpu_custom_call.1} parent=11 // pred_check
          %p127 = pneg %p83
        $region18: #{tpu_custom_call.1} parent=11 // pred_check_branch
          %129 = sbr.rel (%p127) target = $region20
        $region19: #{tpu_custom_call.1} parent=11 // pred_region
          _
        $region20: #{tpu_custom_call.1} parent=11 // pred_fallthru
          _
      $region12: #{tpu_custom_call.1} parent=5 // pred_fallthru
        _
      %p130 = scmp.lt.s32.totalorder %s15, 4
      // Predicated region
      $region21: #{tpu_custom_call.1} parent=5 // pred_check
        %p131 = pneg %p130
      $region22: #{tpu_custom_call.1} parent=5 // pred_check_branch
        %133 = sbr.rel (%p131) target = $region24
      $region23: #{tpu_custom_call.1} parent=5 // pred_region
        // Predicated region
        $region25: #{tpu_custom_call.1} parent=23 // pred_check
          %p134 = pneg %p35
        $region26: #{tpu_custom_call.1} parent=23 // pred_check_branch
          %136 = sbr.rel (%p134) target = $region28
        $region27: #{tpu_custom_call.1} parent=23 // pred_region
          %s137 = sand.u32 %s25, 1
          %s138 = scalar_lea.sflag [#allocation3], %s137
          %s139 = sand.u32 %s25, 1
          %s140 = smul.addr %s139, 128
          %s141 = scalar_lea.vmem [#allocation2], %s140
          %s143 = ssub.s32 2048, 2048
          %144 = vsyncadd %s138, %s143
          %s145 = smul.addr %s15, 16
          %s146 = smul.addr %s145, 128
          %s147 = scalar_lea.hbm %s0, %s146
          %s148 = sshll.u32 %s141, 4
          %s149 = int_to_ptr.vmem [resolvable:$true] %s148
          %154 = dma.hbm_to_vmem [thread:$0]  %s147, 2048, %s149, %s138, 256, 256, 16
        $region28: #{tpu_custom_call.1} parent=23 // pred_fallthru
          _
      $region24: #{tpu_custom_call.1} parent=5 // pred_fallthru
        _
      %p155 = scmp.le.s32.totalorder 1, %s15
      %p156 = scmp.lt.s32.totalorder %s15, 5
      %p157 = pnand %p155, %p156
      %p158 = pneg %p157
      // Predicated region
      $region29: #{tpu_custom_call.1} parent=5 // pred_check
        _
      $region30: #{tpu_custom_call.1} parent=5 // pred_check_branch
        %160 = sbr.rel (%p157) target = $region32
      $region31: #{tpu_custom_call.1} parent=5 // pred_region
        %s161 = ssub.s32 %s15, 1
        %s162 = sand.u32 %s28, 1
        %s163 = scalar_lea.sflag [#allocation3], %s162
        %s164 = sand.u32 %s28, 1
        %s165 = smul.addr %s164, 128
        %s166 = scalar_lea.vmem [#allocation2], %s165
        // Predicated region
        $region33: #{tpu_custom_call.1} parent=31 // pred_check
          %p167 = pneg %p41
        $region34: #{tpu_custom_call.1} parent=31 // pred_check_branch
          %169 = sbr.rel (%p167) target = $region36
        $region35: #{tpu_custom_call.1} parent=31 // pred_region
          %170 = dma.done %s163, 2048
        $region36: #{tpu_custom_call.1} parent=31 // pred_fallthru
          _
        %s171 = sand.u32 %s28, 1
        %s172 = scalar_lea.sflag [#allocation3], %s171
        %s173 = sand.u32 %s28, 1
        %s174 = smul.addr %s173, 128
        %s175 = scalar_lea.vmem [#allocation2], %s174
        %p176 = pneg %p41
        %p177 = pneg %p38
        %p178 = pneg %p62
        %p179 = pneg %p59
        %p180 = pneg %p83
        %p181 = pneg %p80
        %p182 = pneg %p109
        %p183 = pneg %p106
        %s184 = sand.u32 %s96, 1
        %s185 = scalar_lea.sflag [#allocation4], %s184
        %s186 = sand.u32 %s96, 1
        %s187 = smul.addr %s186, 128
        %s188 = scalar_lea.vmem [#allocation5], %s187
        %v189 = vld [vmem:[%s166] sm:$0xff]
        %v190 = vld [vmem:[%s166 + $0x8] sm:$0xff]
        %v191 = vld [vmem:[%s166 + $0x10] sm:$0xff]
        %v192 = vld [vmem:[%s166 + $0x18] sm:$0xff]
        %v193 = vld [vmem:[%s166 + $0x20] sm:$0xff]
        %v194 = vld [vmem:[%s166 + $0x28] sm:$0xff]
        %v195 = vld [vmem:[%s166 + $0x30] sm:$0xff]
        %v196 = vld [vmem:[%s166 + $0x38] sm:$0xff]
        %v197 = vld [vmem:[%s166 + $0x40] sm:$0xff]
        %v198 = vld [vmem:[%s166 + $0x48] sm:$0xff]
        %v199 = vld [vmem:[%s166 + $0x50] sm:$0xff]
        %v200 = vld [vmem:[%s166 + $0x58] sm:$0xff]
        %v201 = vld [vmem:[%s166 + $0x60] sm:$0xff]
        %v202 = vld [vmem:[%s166 + $0x68] sm:$0xff]
        %v203 = vld [vmem:[%s166 + $0x70] sm:$0xff]
        %v204 = vld [vmem:[%s166 + $0x78] sm:$0xff]
        %v205 = vadd.f32 %v189, %v190
        %206 = vadd.xlane.f32.xlu0 %v205
        %v207 = vpop.xlane.xlu0 %206
        %v208 = vadd.f32 %v191, %v192
        %209 = vadd.xlane.f32.xlu0 %v208
        %v210 = vpop.xlane.xlu0 %209
        %v211 = vadd.f32 %v193, %v194
        %212 = vadd.xlane.f32.xlu0 %v211
        %v213 = vpop.xlane.xlu0 %212
        %v214 = vadd.f32 %v195, %v196
        %215 = vadd.xlane.f32.xlu0 %v214
        %v216 = vpop.xlane.xlu0 %215
        %v217 = vadd.f32 %v197, %v198
        %218 = vadd.xlane.f32.xlu0 %v217
        %v219 = vpop.xlane.xlu0 %218
        %v220 = vadd.f32 %v199, %v200
        %221 = vadd.xlane.f32.xlu0 %v220
        %v222 = vpop.xlane.xlu0 %221
        %v223 = vadd.f32 %v201, %v202
        %224 = vadd.xlane.f32.xlu0 %v223
        %v225 = vpop.xlane.xlu0 %224
        %v226 = vadd.f32 %v203, %v204
        %227 = vadd.xlane.f32.xlu0 %v226
        %v228 = vpop.xlane.xlu0 %227
        %v229 = vmul.f32 %v207, 0.00390625
        %v230 = vmul.f32 %v210, 0.00390625
        %v231 = vmul.f32 %v213, 0.00390625
        %v232 = vmul.f32 %v216, 0.00390625
        %v233 = vmul.f32 %v219, 0.00390625
        %v234 = vmul.f32 %v222, 0.00390625
        %v235 = vmul.f32 %v225, 0.00390625
        %v236 = vmul.f32 %v228, 0.00390625
        %v237 = vmax.f32 %v189, %v190
        %238 = vmax.xlane.f32.xlu0 %v237
        %v239 = vpop.xlane.xlu0 %238
        %v240 = vmax.f32 %v191, %v192
        %241 = vmax.xlane.f32.xlu0 %v240
        %v242 = vpop.xlane.xlu0 %241
        %v243 = vmax.f32 %v193, %v194
        %244 = vmax.xlane.f32.xlu0 %v243
        %v245 = vpop.xlane.xlu0 %244
        %v246 = vmax.f32 %v195, %v196
        %247 = vmax.xlane.f32.xlu0 %v246
        %v248 = vpop.xlane.xlu0 %247
        %v249 = vmax.f32 %v197, %v198
        %250 = vmax.xlane.f32.xlu0 %v249
        %v251 = vpop.xlane.xlu0 %250
        %v252 = vmax.f32 %v199, %v200
        %253 = vmax.xlane.f32.xlu0 %v252
        %v254 = vpop.xlane.xlu0 %253
        %v255 = vmax.f32 %v201, %v202
        %256 = vmax.xlane.f32.xlu0 %v255
        %v257 = vpop.xlane.xlu0 %256
        %v258 = vmax.f32 %v203, %v204
        %259 = vmax.xlane.f32.xlu0 %v258
        %v260 = vpop.xlane.xlu0 %259
        %v269 = vlaneseq
        %v270 = vand.u32 %v269, 127
        %v271 = vlaneseq
        %v272 = vshrl.u32 %v271, 7
        %v273 = vsub.s32 %v270, %v272
        %v274 = vrot.slane %v229, %v273
        %v275 = vadd.s32 %v270, 4294967288
        %v276 = vlaneseq
        %v277 = vshrl.u32 %v276, 7
        %v278 = vsub.s32 %v275, %v277
        %v279 = vrot.slane %v230, %v278
        %vm280 = vcmask 130112
        %v281 = vsel %vm280, %v279, %v274
        %v282 = vadd.s32 %v270, 4294967280
        %v283 = vlaneseq
        %v284 = vshrl.u32 %v283, 7
        %v285 = vsub.s32 %v282, %v284
        %v286 = vrot.slane %v231, %v285
        %vm287 = vcmask 195712
        %v288 = vsel %vm287, %v286, %v281
        %v289 = vadd.s32 %v270, 4294967272
        %v290 = vlaneseq
        %v291 = vshrl.u32 %v290, 7
        %v292 = vsub.s32 %v289, %v291
        %v293 = vrot.slane %v232, %v292
        %vm294 = vcmask 261312
        %v295 = vsel %vm294, %v293, %v288
        %v296 = vadd.s32 %v270, 4294967264
        %v297 = vlaneseq
        %v298 = vshrl.u32 %v297, 7
        %v299 = vsub.s32 %v296, %v298
        %v300 = vrot.slane %v233, %v299
        %vm301 = vcmask 326912
        %v302 = vsel %vm301, %v300, %v295
        %v303 = vadd.s32 %v270, 4294967256
        %v304 = vlaneseq
        %v305 = vshrl.u32 %v304, 7
        %v306 = vsub.s32 %v303, %v305
        %v307 = vrot.slane %v234, %v306
        %vm308 = vcmask 392512
        %v309 = vsel %vm308, %v307, %v302
        %v310 = vadd.s32 %v270, 4294967248
        %v311 = vlaneseq
        %v312 = vshrl.u32 %v311, 7
        %v313 = vsub.s32 %v310, %v312
        %v314 = vrot.slane %v235, %v313
        %vm315 = vcmask 458112
        %v316 = vsel %vm315, %v314, %v309
        %v317 = vadd.s32 %v270, 4294967240
        %v318 = vlaneseq
        %v319 = vshrl.u32 %v318, 7
        %v320 = vsub.s32 %v317, %v319
        %v321 = vrot.slane %v236, %v320
        %vm322 = vcmask 523712
        %v323 = vsel %vm322, %v321, %v316
        %v333 = vlaneseq
        %v334 = vshrl.u32 %v333, 7
        %v335 = vsub.s32 %v270, %v334
        %v336 = vrot.slane %v239, %v335
        %v337 = vlaneseq
        %v338 = vshrl.u32 %v337, 7
        %v339 = vsub.s32 %v275, %v338
        %v340 = vrot.slane %v242, %v339
        %v341 = vsel %vm280, %v340, %v336
        %v342 = vlaneseq
        %v343 = vshrl.u32 %v342, 7
        %v344 = vsub.s32 %v282, %v343
        %v345 = vrot.slane %v245, %v344
        %v346 = vsel %vm287, %v345, %v341
        %v347 = vlaneseq
        %v348 = vshrl.u32 %v347, 7
        %v349 = vsub.s32 %v289, %v348
        %v350 = vrot.slane %v248, %v349
        %v351 = vsel %vm294, %v350, %v346
        %v352 = vlaneseq
        %v353 = vshrl.u32 %v352, 7
        %v354 = vsub.s32 %v296, %v353
        %v355 = vrot.slane %v251, %v354
        %v356 = vsel %vm301, %v355, %v351
        %v357 = vlaneseq
        %v358 = vshrl.u32 %v357, 7
        %v359 = vsub.s32 %v303, %v358
        %v360 = vrot.slane %v254, %v359
        %v361 = vsel %vm308, %v360, %v356
        %v362 = vlaneseq
        %v363 = vshrl.u32 %v362, 7
        %v364 = vsub.s32 %v310, %v363
        %v365 = vrot.slane %v257, %v364
        %v366 = vsel %vm315, %v365, %v361
        %v367 = vlaneseq
        %v368 = vshrl.u32 %v367, 7
        %v369 = vsub.s32 %v317, %v368
        %v370 = vrot.slane %v260, %v369
        %v371 = vsel %vm322, %v370, %v366
        %vm373 = vcmask 1040384
        %v374 = vsel %vm373, %v323, %v371
        %v375 = vld [vmem:[%s1] sm:$0xf]
        %v376 = vld [vmem:[%s2] sm:$0xff]
        %v377 = vld [vmem:[%s2 + $0x8] sm:$0xff]
        %v378 = vld [vmem:[%s2 + $0x10] sm:$0xff]
        %v379 = vld [vmem:[%s2 + $0x18] sm:$0xff]
        %v380 = vld [vmem:[%s2 + $0x20] sm:$0xff]
        %v381 = vld [vmem:[%s2 + $0x28] sm:$0xff]
        %v382 = vld [vmem:[%s2 + $0x30] sm:$0xff]
        %v383 = vld [vmem:[%s2 + $0x38] sm:$0xff]
        %vm384 = vcmask 523264
        %v386 = vsel %vm384, %v374, 0
        %v389 = vsel %vm384, %v375, 0
        %391 = vmatprep.subr.mxu0 0.0
        %392 = vmatpush1.xpose.msra.mxu0 0.0
        %393 = vmatprep.subr.mxu0 0.0
        %394 = vmatpush1.xpose.msra.mxu0 0.0
        %395 = vmatprep.subr.mxu0 0.0
        %396 = vmatpush1.xpose.msra.mxu0 0.0
        %397 = vmatprep.subr.mxu0 0.0
        %398 = vmatpush1.xpose.msra.mxu0 0.0
        %399 = vmatprep.subr.mxu0 0.0
        %400 = vmatpush1.xpose.msra.mxu0 0.0
        %401 = vmatprep.subr.mxu0 0.0
        %402 = vmatpush1.xpose.msra.mxu0 0.0
        %403 = vmatprep.subr.mxu0 0.0
        %404 = vmatpush1.xpose.msra.mxu0 0.0
        %405 = vmatprep.subr.mxu0 0.0
        %406 = vmatpush1.xpose.msra.mxu0 0.0
        %407 = vmatprep.subr.mxu0 0.0
        %408 = vmatpush1.xpose.msra.mxu0 0.0
        %409 = vmatprep.subr.mxu0 0.0
        %410 = vmatpush1.xpose.msra.mxu0 0.0
        %411 = vmatprep.subr.mxu0 0.0
        %412 = vmatpush1.xpose.msra.mxu0 0.0
        %413 = vmatprep.subr.mxu0 0.0
        %414 = vmatpush1.xpose.msra.mxu0 0.0
        %415 = vmatprep.subr.mxu0 0.0
        %416 = vmatpush1.xpose.msra.mxu0 0.0
        %417 = vmatprep.subr.mxu0 0.0
        %418 = vmatpush1.xpose.msra.mxu0 0.0
        %419 = vmatprep.subr.mxu0 0.0
        %420 = vmatpush1.xpose.msra.mxu0 0.0
        %421 = vmatprep.subr.mxu0 0.0
        %422 = vmatpush1.xpose.msra.mxu0 %v389
        %423 = vmatprep.subr.mxu0 0.0
        %424 = vmatpush2.xpose.msra.mxu0 0.0
        %425 = vmatprep.subr.mxu0 0.0
        %426 = vmatpush2.xpose.msra.mxu0 0.0
        %427 = vmatprep.subr.mxu0 0.0
        %428 = vmatpush2.xpose.msra.mxu0 0.0
        %429 = vmatprep.subr.mxu0 0.0
        %430 = vmatpush2.xpose.msra.mxu0 0.0
        %431 = vmatprep.subr.mxu0 0.0
        %432 = vmatpush2.xpose.msra.mxu0 0.0
        %433 = vmatprep.subr.mxu0 0.0
        %434 = vmatpush2.xpose.msra.mxu0 0.0
        %435 = vmatprep.subr.mxu0 0.0
        %436 = vmatpush2.xpose.msra.mxu0 0.0
        %437 = vmatprep.subr.mxu0 0.0
        %438 = vmatpush2.xpose.msra.mxu0 0.0
        %439 = vmatprep.subr.mxu0 0.0
        %440 = vmatpush2.xpose.msra.mxu0 0.0
        %441 = vmatprep.subr.mxu0 0.0
        %442 = vmatpush2.xpose.msra.mxu0 0.0
        %443 = vmatprep.subr.mxu0 0.0
        %444 = vmatpush2.xpose.msra.mxu0 0.0
        %445 = vmatprep.subr.mxu0 0.0
        %446 = vmatpush2.xpose.msra.mxu0 0.0
        %447 = vmatprep.subr.mxu0 0.0
        %448 = vmatpush2.xpose.msra.mxu0 0.0
        %449 = vmatprep.subr.mxu0 0.0
        %450 = vmatpush2.xpose.msra.mxu0 0.0
        %451 = vmatprep.subr.mxu0 0.0
        %452 = vmatpush2.xpose.msra.mxu0 0.0
        %453 = vmatprep.subr.mxu0 0.0
        %454 = vmatpush2.xpose.msra.mxu0 0.0
        %455 = vmatprep.mubr.f32.mxu0 0.0
        %456 = vmatmul.mubr.f32.gmra.mxu0 %v386
        %v457 = vpop.f32.mrf.mxu0
        %v458 = vadd.f32 0.0, %v457
        %v459 = vpop.f32.mrf.mxu0
        %460 = vdwg.mxu0
        %v461 = vmax.f32 %v458, 0.0
        %vm462 = vcmask 31744
        %v464 = vsel %vm462, %v461, 0
        %v467 = vsel %vm462, %v376, 0
        %v470 = vsel %vm462, %v377, 0
        %v473 = vsel %vm462, %v378, 0
        %v476 = vsel %vm462, %v379, 0
        %v479 = vsel %vm462, %v380, 0
        %v482 = vsel %vm462, %v381, 0
        %v485 = vsel %vm462, %v382, 0
        %v488 = vsel %vm462, %v383, 0
        %490 = vmatprep.subr.mxu0 0.0
        %491 = vmatpush1.xpose.msra.mxu0 0.0
        %492 = vmatprep.subr.mxu0 0.0
        %493 = vmatpush1.xpose.msra.mxu0 0.0
        %494 = vmatprep.subr.mxu0 0.0
        %495 = vmatpush1.xpose.msra.mxu0 0.0
        %496 = vmatprep.subr.mxu0 0.0
        %497 = vmatpush1.xpose.msra.mxu0 0.0
        %498 = vmatprep.subr.mxu0 0.0
        %499 = vmatpush1.xpose.msra.mxu0 0.0
        %500 = vmatprep.subr.mxu0 0.0
        %501 = vmatpush1.xpose.msra.mxu0 0.0
        %502 = vmatprep.subr.mxu0 0.0
        %503 = vmatpush1.xpose.msra.mxu0 0.0
        %504 = vmatprep.subr.mxu0 0.0
        %505 = vmatpush1.xpose.msra.mxu0 0.0
        %506 = vmatprep.subr.mxu0 0.0
        %507 = vmatpush1.xpose.msra.mxu0 %v488
        %508 = vmatprep.subr.mxu0 0.0
        %509 = vmatpush1.xpose.msra.mxu0 %v485
        %510 = vmatprep.subr.mxu0 0.0
        %511 = vmatpush1.xpose.msra.mxu0 %v482
        %512 = vmatprep.subr.mxu0 0.0
        %513 = vmatpush1.xpose.msra.mxu0 %v479
        %514 = vmatprep.subr.mxu0 0.0
        %515 = vmatpush1.xpose.msra.mxu0 %v476
        %516 = vmatprep.subr.mxu0 0.0
        %517 = vmatpush1.xpose.msra.mxu0 %v473
        %518 = vmatprep.subr.mxu0 0.0
        %519 = vmatpush1.xpose.msra.mxu0 %v470
        %520 = vmatprep.subr.mxu0 0.0
        %521 = vmatpush1.xpose.msra.mxu0 %v467
        %522 = vmatprep.subr.mxu0 0.0
        %523 = vmatpush2.xpose.msra.mxu0 0.0
        %524 = vmatprep.subr.mxu0 0.0
        %525 = vmatpush2.xpose.msra.mxu0 0.0
        %526 = vmatprep.subr.mxu0 0.0
        %527 = vmatpush2.xpose.msra.mxu0 0.0
        %528 = vmatprep.subr.mxu0 0.0
        %529 = vmatpush2.xpose.msra.mxu0 0.0
        %530 = vmatprep.subr.mxu0 0.0
        %531 = vmatpush2.xpose.msra.mxu0 0.0
        %532 = vmatprep.subr.mxu0 0.0
        %533 = vmatpush2.xpose.msra.mxu0 0.0
        %534 = vmatprep.subr.mxu0 0.0
        %535 = vmatpush2.xpose.msra.mxu0 0.0
        %536 = vmatprep.subr.mxu0 0.0
        %537 = vmatpush2.xpose.msra.mxu0 0.0
        %538 = vmatprep.subr.mxu0 0.0
        %539 = vmatpush2.xpose.msra.mxu0 0.0
        %540 = vmatprep.subr.mxu0 0.0
        %541 = vmatpush2.xpose.msra.mxu0 0.0
        %542 = vmatprep.subr.mxu0 0.0
        %543 = vmatpush2.xpose.msra.mxu0 0.0
        %544 = vmatprep.subr.mxu0 0.0
        %545 = vmatpush2.xpose.msra.mxu0 0.0
        %546 = vmatprep.subr.mxu0 0.0
        %547 = vmatpush2.xpose.msra.mxu0 0.0
        %548 = vmatprep.subr.mxu0 0.0
        %549 = vmatpush2.xpose.msra.mxu0 0.0
        %550 = vmatprep.subr.mxu0 0.0
        %551 = vmatpush2.xpose.msra.mxu0 0.0
        %552 = vmatprep.subr.mxu0 0.0
        %553 = vmatpush2.xpose.msra.mxu0 0.0
        %554 = vmatprep.mubr.f32.mxu0 0.0
        %555 = vmatmul.mubr.f32.gmra.mxu0 %v464
        %v556 = vpop.f32.mrf.mxu0
        %v557 = vadd.f32 0.0, %v556
        %v558 = vpop.f32.mrf.mxu0
        %559 = vdwg.mxu0
        %v561 = vrot.slane %v557, 1
        %v563 = vadd.f32 %v557, %v561
        %v564 = vxor.u32 %v563, 2147483648
        %v565 = vmul.f32 %v564, 1.442695
        %v566 = vpow.pop %v565
        %v567 = vadd.f32 %v566, 1.0
        %v568 = vrcp.pop %v567
        %v569 = vmul.f32 1.0, %v568
        %v570 = vlaneseq
        %v571 = vshrl.u32 %v570, 7
        %v572 = vsub.s32 0, %v571
        %v573 = vrot.slane %v569, %v572
        %575 = vbcast.lane.b32.xlu0 %v573, 256
        %v576 = vpop.permute.xlu0 %575
        %s578 = sor.u32 256, 8
        %579 = vbcast.lane.b32.xlu0 %v573, %s578
        %v580 = vpop.permute.xlu0 %579
        %s582 = sor.u32 256, 16
        %583 = vbcast.lane.b32.xlu0 %v573, %s582
        %v584 = vpop.permute.xlu0 %583
        %s586 = sor.u32 256, 24
        %587 = vbcast.lane.b32.xlu0 %v573, %s586
        %v588 = vpop.permute.xlu0 %587
        %s590 = sor.u32 256, 32
        %591 = vbcast.lane.b32.xlu0 %v573, %s590
        %v592 = vpop.permute.xlu0 %591
        %s594 = sor.u32 256, 40
        %595 = vbcast.lane.b32.xlu0 %v573, %s594
        %v596 = vpop.permute.xlu0 %595
        %s598 = sor.u32 256, 48
        %599 = vbcast.lane.b32.xlu0 %v573, %s598
        %v600 = vpop.permute.xlu0 %599
        %s602 = sor.u32 256, 56
        %603 = vbcast.lane.b32.xlu0 %v573, %s602
        %v604 = vpop.permute.xlu0 %603
        %v605 = vmul.f32 %v576, %v189
        %v606 = vmul.f32 %v576, %v190
        %v607 = vmul.f32 %v580, %v191
        %v608 = vmul.f32 %v580, %v192
        %v609 = vmul.f32 %v584, %v193
        %v610 = vmul.f32 %v584, %v194
        %v611 = vmul.f32 %v588, %v195
        %v612 = vmul.f32 %v588, %v196
        %v613 = vmul.f32 %v592, %v197
        %v614 = vmul.f32 %v592, %v198
        %v615 = vmul.f32 %v596, %v199
        %v616 = vmul.f32 %v596, %v200
        %v617 = vmul.f32 %v600, %v201
        %v618 = vmul.f32 %v600, %v202
        %v619 = vmul.f32 %v604, %v203
        %v620 = vmul.f32 %v604, %v204
        %621 = vst [vmem:[%s188] sm:$0xff] %v605
        %622 = vst [vmem:[%s188 + $0x8] sm:$0xff] %v606
        %623 = vst [vmem:[%s188 + $0x10] sm:$0xff] %v607
        %624 = vst [vmem:[%s188 + $0x18] sm:$0xff] %v608
        %625 = vst [vmem:[%s188 + $0x20] sm:$0xff] %v609
        %626 = vst [vmem:[%s188 + $0x28] sm:$0xff] %v610
        %627 = vst [vmem:[%s188 + $0x30] sm:$0xff] %v611
        %628 = vst [vmem:[%s188 + $0x38] sm:$0xff] %v612
        %629 = vst [vmem:[%s188 + $0x40] sm:$0xff] %v613
        %630 = vst [vmem:[%s188 + $0x48] sm:$0xff] %v614
        %631 = vst [vmem:[%s188 + $0x50] sm:$0xff] %v615
        %632 = vst [vmem:[%s188 + $0x58] sm:$0xff] %v616
        %633 = vst [vmem:[%s188 + $0x60] sm:$0xff] %v617
        %634 = vst [vmem:[%s188 + $0x68] sm:$0xff] %v618
        %635 = vst [vmem:[%s188 + $0x70] sm:$0xff] %v619
        %636 = vst [vmem:[%s188 + $0x78] sm:$0xff] %v620
        %s637 = sand.u32 %s96, 1
        %s638 = scalar_lea.sflag [#allocation4], %s637
        %s639 = sand.u32 %s96, 1
        %s640 = smul.addr %s639, 128
        %s641 = scalar_lea.vmem [#allocation5], %s640
        // Predicated region
        $region37: #{tpu_custom_call.1} parent=31 // pred_check
          %p642 = pneg %p106
        $region38: #{tpu_custom_call.1} parent=31 // pred_check_branch
          %644 = sbr.rel (%p642) target = $region40
        $region39: #{tpu_custom_call.1} parent=31 // pred_region
          %s646 = ssub.s32 2048, 2048
          %647 = vsyncadd %s638, %s646
          %s648 = smul.addr %s20, 16
          %s649 = smul.addr %s648, 128
          %s650 = scalar_lea.hbm %s3, %s649
          %s651 = sshll.u32 %s641, 4
          %s652 = int_to_ptr.vmem [resolvable:$true] %s651
          %657 = dma.vmem_to_hbm [thread:$0]  %s652, 2048, %s650, %s638, 256, 256, 16
        $region40: #{tpu_custom_call.1} parent=31 // pred_fallthru
          _
      $region32: #{tpu_custom_call.1} parent=5 // pred_fallthru
        _
      %p658 = scmp.le.s32.totalorder 2, %s15
      // Predicated region
      $region41: #{tpu_custom_call.1} parent=5 // pred_check
        %p659 = pneg %p658
      $region42: #{tpu_custom_call.1} parent=5 // pred_check_branch
        %661 = sbr.rel (%p659) target = $region44
      $region43: #{tpu_custom_call.1} parent=5 // pred_region
        %s662 = ssub.s32 %s15, 2
        // Predicated region
        $region45: #{tpu_custom_call.1} parent=43 // pred_check
          %p663 = pneg %p112
        $region46: #{tpu_custom_call.1} parent=43 // pred_check_branch
          %665 = sbr.rel (%p663) target = $region48
        $region47: #{tpu_custom_call.1} parent=43 // pred_region
          %s666 = sand.u32 %s97, 1
          %s667 = scalar_lea.sflag [#allocation4], %s666
          %s668 = sand.u32 %s97, 1
          %s669 = smul.addr %s668, 128
          %s670 = scalar_lea.vmem [#allocation5], %s669
          %671 = dma.done %s667, 2048
        $region48: #{tpu_custom_call.1} parent=43 // pred_fallthru
          _
      $region44: #{tpu_custom_call.1} parent=5 // pred_fallthru
        _
    $region6: #{tpu_custom_call.1} parent=1 // loop_footer
      %s19 = sadd.s32 1, %s15
    $region7: #{tpu_custom_call.1} parent=1 // loop_footer_branch
      %14 = sbr.rel target = $region3
    $region8: #{tpu_custom_call.1} parent=1 // loop_exit
      _
    %672 = vsyncpa [#allocation3], 1
    %s673 = scalar_lea.sflag [#allocation3], 1
    %674 = vsyncpa %s673, 1
    %675 = vsyncpa [#allocation4], 1
    %s676 = scalar_lea.sflag [#allocation4], 1
    %677 = vsyncpa %s676, 1

</llo_original>
